<compile_context>
chip_gen: v6e
topology: v6e:2x2x1
jax: 0.10.0
libtpu: 0.0.40
codegen_flags: <defaults>
</compile_context>

<pallas_src>
import functools
import math

import jax
import jax.numpy as jnp
import numpy as np
from jax.experimental import pallas as pl
from jax.experimental.pallas import tpu as pltpu


# -----------------------------------------------------------------------------
# Gabor weight construction (deterministic, mirrors the PyTorch __init__)
# -----------------------------------------------------------------------------
def _create_gabor_kernel(kernel_size, sigma, theta, lambda_val, gamma, psi):
    x_range = y_range = (kernel_size - 1) // 2
    y, x = np.meshgrid(np.arange(-x_range, x_range + 1),
                       np.arange(-y_range, y_range + 1))
    x_theta = x * np.cos(theta) + y * np.sin(theta)
    y_theta = -x * np.sin(theta) + y * np.cos(theta)
    gb = np.exp(-0.5 * (x_theta ** 2 + (gamma * y_theta) ** 2) / sigma ** 2)
    gb *= np.cos(2 * np.pi * x_theta / lambda_val + psi)
    return gb.astype(np.float32)


def make_gabor_weights(num_filters=10, kernel_size=5):
    w = np.zeros((num_filters, 1, kernel_size, kernel_size), dtype=np.float32)
    for i in range(num_filters):
        theta = i * math.pi / num_filters
        w[i, 0] = _create_gabor_kernel(kernel_size, 3.0, theta, 4.0, 0.5, 0.0)
    return jnp.asarray(w)


# -----------------------------------------------------------------------------
# Banded ("Toeplitz") weight matrix.  Folds all kw taps and all F filters of one
# kernel row kh into a single matmul operand:
#   B[kh, j + kw, f*W_OUT + j] = w[f, 0, kh, kw]
# so that  (x[i+kh, :]  @  B[kh])[f*W_OUT + j] = sum_kw x[i+kh, j+kw]*w[f,kh,kw].
# The lane axis is zero-padded to a multiple of 128 so kernel stores are
# unmasked full-vreg writes.
# -----------------------------------------------------------------------------
def build_banded_weights(weight, W, lane_multiple=128):
    F, _, K, _ = weight.shape
    W_OUT = W - K + 1
    FP = ((F * W_OUT + lane_multiple - 1) // lane_multiple) * lane_multiple
    wnp = np.asarray(weight, dtype=np.float32)
    B = np.zeros((K, W, FP), dtype=np.float32)
    j = np.arange(W_OUT)
    for f in range(F):
        for kh in range(K):
            for kw in range(K):
                B[kh, j + kw, f * W_OUT + j] = wnp[f, 0, kh, kw]
    return jnp.asarray(B), FP


# -----------------------------------------------------------------------------
# Pallas kernel
# -----------------------------------------------------------------------------
def _gabor_conv_kernel(x_ref, b_ref, o_ref, *, NB, K, H_OUT):
    # x_ref: (NB, 1, H, W)   VMEM input block
    # b_ref: (K, W, FP)      VMEM banded weights (lane axis padded to 128x)
    # o_ref: (NB, H_OUT, FP) VMEM lane-dense output block
    #
    # Hoist the banded-weight loads: read each (W, FP) matrix from VMEM once
    # per grid step and reuse across all NB images.
    bmats = [b_ref[kh] for kh in range(K)]
    for nb in range(NB):                                   # static unroll, NB small
        img = x_ref[nb, 0]                                 # (H, W)
        # K MXU matmuls; kh slices move only along the sublane direction
        # (no lane-shifted window copies are materialised).
        acc = jnp.dot(img[0:H_OUT, :], bmats[0],
                      preferred_element_type=jnp.float32)
        for kh in range(1, K):
            acc = acc + jnp.dot(img[kh:kh + H_OUT, :], bmats[kh],
                                preferred_element_type=jnp.float32)
        # One wide, lane-dense (multiple-of-128 lanes -> unmasked vst) store
        # per image instead of F narrow masked stores.
        o_ref[nb] = acc.astype(o_ref.dtype)


def _pick_block_n(N, H, W, H_OUT, FP):
    """Images per grid step: amortise ~0.35us per-step overhead, stay well
    inside VMEM (v7x has 64 MiB total; BlockSpec double-buffers), and keep
    >= 2 grid points when N allows so both megacore TensorCores get work."""
    def fits(nb):
        return 2 * nb * (H * W + H_OUT * FP) * 4 <= (8 << 20)
    divisors = [d for d in range(1, N + 1) if N % d == 0 and fits(d)]
    if not divisors:
        return 1
    multi = [d for d in divisors if N // d >= 2]
    return max(multi) if multi else max(divisors)


def gabor_filter_forward(x, weight):
    """x: (N, 1, H, W) float32, weight: (F, 1, K, K) float32 -> (N, F, H-K+1, W-K+1)."""
    N, C, H, W = x.shape
    F, _, K, _ = weight.shape
    assert C == 1, "GaborFilter expects single-channel input"
    H_OUT, W_OUT = H - K + 1, W - K + 1

    banded, FP = build_banded_weights(weight, W)      # (K, W, FP) -> VMEM
    NB = _pick_block_n(N, H, W, H_OUT, FP)
    kernel = functools.partial(_gabor_conv_kernel, NB=NB, K=K, H_OUT=H_OUT)

    out_flat = pl.pallas_call(
        kernel,
        out_shape=jax.ShapeDtypeStruct((N, H_OUT, FP), x.dtype),
        grid_spec=pltpu.PrefetchScalarGridSpec(
            num_scalar_prefetch=0,
            grid=(N // NB,),
            in_specs=[
                pl.BlockSpec((NB, 1, H, W), lambda n: (n, 0, 0, 0)),
                pl.BlockSpec((K, W, FP), lambda n: (0, 0, 0)),
            ],
            out_specs=pl.BlockSpec((NB, H_OUT, FP), lambda n: (n, 0, 0)),
        ),
        compiler_params=pltpu.CompilerParams(
            dimension_semantics=("parallel",)),
    )(x, banded)

    # Drop the lane padding and convert the lane-dense kernel layout to NCHW in
    # the wrapper (cheap XLA slice/reshape/transpose).
    out = out_flat[..., :F * W_OUT].reshape(N, H_OUT, F, W_OUT)
    return jnp.transpose(out, (0, 2, 1, 3))


# -----------------------------------------------------------------------------
# Main
# -----------------------------------------------------------------------------
if __name__ == "__main__":
    num_filters, kernel_size = 10, 5
    N, C, H, W = 2, 1, 16, 16

    key = jax.random.PRNGKey(0)
    x = jax.random.normal(key, (N, C, H, W), dtype=jnp.float32)
    weight = make_gabor_weights(num_filters, kernel_size)

    out = gabor_filter_forward(x, weight)
    out = jax.block_until_ready(out)

    # Reference check against XLA conv (same semantics as torch conv2d, VALID).
    ref = jax.lax.conv_general_dilated(
        x, weight, window_strides=(1, 1), padding="VALID",
        dimension_numbers=("NCHW", "OIHW", "NCHW"))
    ref = jax.block_until_ready(ref)

    assert out.shape == (N, num_filters, H - kernel_size + 1, W - kernel_size + 1)
    np.testing.assert_allclose(np.asarray(out), np.asarray(ref),
                               rtol=1e-5, atol=1e-5)
    print("KERNEL_OK")
</pallas_src>

<mosaic_0001>
module attributes {stable_mosaic.version = 11 : i64} {
  func.func @_gabor_conv_kernel(%arg0: i32, %arg1: memref<1x1x16x16xf32, #tpu.memory_space<vmem>>, %arg2: memref<5x16x128xf32, #tpu.memory_space<vmem>>, %arg3: memref<1x12x128xf32, #tpu.memory_space<vmem>>) attributes {dimension_semantics = [#tpu.dimension_semantics<parallel>], iteration_bounds = array<i64: 2>, scalar_prefetch = 0 : i64, scratch_operands = 0 : i64, tpu.core_type = #tpu.core_type<tc>, window_params = [{transform_indices = @transform_0, window_bounds = array<i64: 1, 1, 16, 16>}, {pipeline_mode = #tpu.pipeline_mode<synchronous>, transform_indices = @transform_1, window_bounds = array<i64: 5, 16, 128>}, {transform_indices = @transform_2, window_bounds = array<i64: 1, 12, 128>}]} {
    %c0 = arith.constant 0 : index
    %c0_0 = arith.constant 0 : index
    %c0_1 = arith.constant 0 : index
    %0 = vector.load %arg2[%c0, %c0_0, %c0_1] : memref<5x16x128xf32, #tpu.memory_space<vmem>>, vector<1x16x128xf32>
    %1 = vector.shape_cast %0 : vector<1x16x128xf32> to vector<16x128xf32>
    %c1 = arith.constant 1 : index
    %c0_2 = arith.constant 0 : index
    %c0_3 = arith.constant 0 : index
    %2 = vector.load %arg2[%c1, %c0_2, %c0_3] : memref<5x16x128xf32, #tpu.memory_space<vmem>>, vector<1x16x128xf32>
    %3 = vector.shape_cast %2 : vector<1x16x128xf32> to vector<16x128xf32>
    %c2 = arith.constant 2 : index
    %c0_4 = arith.constant 0 : index
    %c0_5 = arith.constant 0 : index
    %4 = vector.load %arg2[%c2, %c0_4, %c0_5] : memref<5x16x128xf32, #tpu.memory_space<vmem>>, vector<1x16x128xf32>
    %5 = vector.shape_cast %4 : vector<1x16x128xf32> to vector<16x128xf32>
    %c3 = arith.constant 3 : index
    %c0_6 = arith.constant 0 : index
    %c0_7 = arith.constant 0 : index
    %6 = vector.load %arg2[%c3, %c0_6, %c0_7] : memref<5x16x128xf32, #tpu.memory_space<vmem>>, vector<1x16x128xf32>
    %7 = vector.shape_cast %6 : vector<1x16x128xf32> to vector<16x128xf32>
    %c4 = arith.constant 4 : index
    %c0_8 = arith.constant 0 : index
    %c0_9 = arith.constant 0 : index
    %8 = vector.load %arg2[%c4, %c0_8, %c0_9] : memref<5x16x128xf32, #tpu.memory_space<vmem>>, vector<1x16x128xf32>
    %9 = vector.shape_cast %8 : vector<1x16x128xf32> to vector<16x128xf32>
    %c0_10 = arith.constant 0 : index
    %c0_11 = arith.constant 0 : index
    %c0_12 = arith.constant 0 : index
    %c0_13 = arith.constant 0 : index
    %10 = vector.load %arg1[%c0_10, %c0_11, %c0_12, %c0_13] : memref<1x1x16x16xf32, #tpu.memory_space<vmem>>, vector<1x1x16x16xf32>
    %11 = vector.shape_cast %10 : vector<1x1x16x16xf32> to vector<16x16xf32>
    %12 = vector.extract_strided_slice %11 {offsets = [0, 0], sizes = [12, 16], strides = [1, 1]} : vector<16x16xf32> to vector<12x16xf32>
    %cst = arith.constant dense<0.000000e+00> : vector<12x128xf32>
    %13 = tpu.matmul %12, %1, %cst {dimension_numbers = #tpu.dot_dimension_numbers<[1], [0], [0], [1], [0, 0, 1, 1], [], []>} : vector<12x16xf32>, vector<16x128xf32>, vector<12x128xf32> -> vector<12x128xf32>
    %14 = vector.extract_strided_slice %11 {offsets = [1, 0], sizes = [12, 16], strides = [1, 1]} : vector<16x16xf32> to vector<12x16xf32>
    %cst_14 = arith.constant dense<0.000000e+00> : vector<12x128xf32>
    %15 = tpu.matmul %14, %3, %cst_14 {dimension_numbers = #tpu.dot_dimension_numbers<[1], [0], [0], [1], [0, 0, 1, 1], [], []>} : vector<12x16xf32>, vector<16x128xf32>, vector<12x128xf32> -> vector<12x128xf32>
    %16 = arith.addf %13, %15 : vector<12x128xf32>
    %17 = vector.extract_strided_slice %11 {offsets = [2, 0], sizes = [12, 16], strides = [1, 1]} : vector<16x16xf32> to vector<12x16xf32>
    %cst_15 = arith.constant dense<0.000000e+00> : vector<12x128xf32>
    %18 = tpu.matmul %17, %5, %cst_15 {dimension_numbers = #tpu.dot_dimension_numbers<[1], [0], [0], [1], [0, 0, 1, 1], [], []>} : vector<12x16xf32>, vector<16x128xf32>, vector<12x128xf32> -> vector<12x128xf32>
    %19 = arith.addf %16, %18 : vector<12x128xf32>
    %20 = vector.extract_strided_slice %11 {offsets = [3, 0], sizes = [12, 16], strides = [1, 1]} : vector<16x16xf32> to vector<12x16xf32>
    %cst_16 = arith.constant dense<0.000000e+00> : vector<12x128xf32>
    %21 = tpu.matmul %20, %7, %cst_16 {dimension_numbers = #tpu.dot_dimension_numbers<[1], [0], [0], [1], [0, 0, 1, 1], [], []>} : vector<12x16xf32>, vector<16x128xf32>, vector<12x128xf32> -> vector<12x128xf32>
    %22 = arith.addf %19, %21 : vector<12x128xf32>
    %23 = vector.extract_strided_slice %11 {offsets = [4, 0], sizes = [12, 16], strides = [1, 1]} : vector<16x16xf32> to vector<12x16xf32>
    %cst_17 = arith.constant dense<0.000000e+00> : vector<12x128xf32>
    %24 = tpu.matmul %23, %9, %cst_17 {dimension_numbers = #tpu.dot_dimension_numbers<[1], [0], [0], [1], [0, 0, 1, 1], [], []>} : vector<12x16xf32>, vector<16x128xf32>, vector<12x128xf32> -> vector<12x128xf32>
    %25 = arith.addf %22, %24 : vector<12x128xf32>
    %c0_18 = arith.constant 0 : index
    %c0_19 = arith.constant 0 : index
    %c0_20 = arith.constant 0 : index
    %26 = vector.load %arg3[%c0_18, %c0_19, %c0_20] : memref<1x12x128xf32, #tpu.memory_space<vmem>>, vector<1x12x128xf32>
    %27 = vector.shape_cast %26 : vector<1x12x128xf32> to vector<12x128xf32>
    %28 = vector.shape_cast %25 : vector<12x128xf32> to vector<1x12x128xf32>
    tpu.vector_store %arg3[%c0_18, %c0_19, %c0_20], %28 {strides = array<i32>} : memref<1x12x128xf32, #tpu.memory_space<vmem>>, vector<1x12x128xf32>,
    return
  }
  func.func @transform_0(%arg0: i32) -> (i32, i32, i32, i32) {
    %c0_i32 = arith.constant 0 : i32
    %c0_i32_0 = arith.constant 0 : i32
    %c0_i32_1 = arith.constant 0 : i32
    %c0_i32_2 = arith.constant 0 : i32
    return %arg0, %c0_i32, %c0_i32_0, %c0_i32_1 : i32, i32, i32, i32
  }
  func.func @transform_1(%arg0: i32) -> (i32, i32, i32) {
    %c0_i32 = arith.constant 0 : i32
    %c0_i32_0 = arith.constant 0 : i32
    %c0_i32_1 = arith.constant 0 : i32
    %c0_i32_2 = arith.constant 0 : i32
    return %c0_i32, %c0_i32_0, %c0_i32_1 : i32, i32, i32
  }
  func.func @transform_2(%arg0: i32) -> (i32, i32, i32) {
    %c0_i32 = arith.constant 0 : i32
    %c0_i32_0 = arith.constant 0 : i32
    %c0_i32_1 = arith.constant 0 : i32
    return %arg0, %c0_i32, %c0_i32_0 : i32, i32, i32
  }
}

</mosaic_0001>

<llo_original>
// kernel: tpu_custom_call.1
$region0: #{tpu_custom_call.1}
  #allocation0 [shape = 'u32[]', space=smem, size = 0x4, offset = 0x4, fixed_abs, tag = 'smem constant byte address 0x4 - core index']
  #allocation1 [shape = 'u32[144,128]{1,0:T(1,128)}', space=vmem, size = 0x12000, scoped, tag = 'internal scratch']
  %s0 = inlined_call_operand.hbm [shape: f32[2,1,16,16], index: 0, kind: input, shape index: {}]
  %s1 = inlined_call_operand.hbm [shape: f32[5,16,128], index: 1, kind: input, shape index: {}]
  %s2 = inlined_call_operand.vmem [shape: f32[2,12,128], index: 2, kind: output, shape index: {}]
  %s3 = sld [smem:[#allocation0]]
  $region49: #{tpu_custom_call.1} parent=0
    _
  %s5 = ssub.s32 1, %s3
  %s6 = scalar_select 0, %s5, %s3
  $region1: #{tpu_custom_call.1} parent=0
    #allocation2 [shape = 'u8[16384]{0}', space=vmem, size = 0x4000, scoped, tag = 'input window, operand 0']
    #allocation3 [shape = 's32[2]{0}', space=sflag, size = 0x8, scoped, tag = 'scoped memory for tpu_custom_call.1']
    #allocation4 [shape = 'u8[40960]{0}', space=vmem, size = 0xa000, scoped, tag = 'input window, operand 1, single buffered']
    #allocation5 [shape = 's32[1]{0}', space=sflag, size = 0x4, scoped, tag = 'scoped memory for tpu_custom_call.1']
    %7 = vsyncpa [#allocation3], 0
    %s8 = scalar_lea.sflag [#allocation3], 1
    %9 = vsyncpa %s8, 0
    %10 = vsyncpa [#allocation5], 0
    loop: start=0, step=1, limit=4
    $region2: #{tpu_custom_call.1} parent=1 // loop_pre_header
      _
    $region3: #{tpu_custom_call.1} parent=1 // loop_header
      %s12 = sphi 0, %s16
      %p13 = scmp.ge.s32.totalorder %s12, 4
      %s22 = sphi 0, %s24
      %s25 = sphi 0, %s22
      %s26 = sphi 0, %s25
      %s42 = sphi 0, %s26
      %s46 = sphi 0, %s46
      %s48 = sphi 0, %s46
      %s49 = sphi 0, %s48
      %s63 = sphi 0, %s49
      %s69 = sphi 0, %s71
      %s72 = sphi 0, %s69
      %s73 = sphi 0, %s72
      %s89 = sphi 0, %s73
    $region4: #{tpu_custom_call.1} parent=1 // loop_header_branch
      %15 = sbr.rel (%p13) target = $region8
    $region5: #{tpu_custom_call.1} parent=1 // loop_body
      %s17 = ssub.s32 %s12, 1
      %s18 = ssub.s32 %s12, 2
      %s19 = sadd.s32 %s12, 1
      %s20 = ssub.s32 %s12, %s19
      %p21 = scmp.eq.s32.totalorder %s20, 0
      %s23 = sadd.s32 %s22, 1
      %s24 = scalar_select %p21, %s22, %s23
      %p27 = pneg %p21
      %p28 = scmp.eq.s32.totalorder %s12, 1
      %p29 = por %p27, %p28
      %p30 = scmp.ne.s32.totalorder %s22, %s25
      %p31 = scmp.eq.s32.totalorder %s12, 0
      %p32 = por %p30, %p31
      %p33 = scmp.ne.s32.totalorder %s22, %s25
      %p34 = scmp.eq.s32.totalorder %s17, 1
      %p35 = por %p33, %p34
      %p36 = scmp.ne.s32.totalorder %s25, %s26
      %p37 = scmp.eq.s32.totalorder %s17, 0
      %p38 = por %p36, %p37
      %p39 = scmp.ne.s32.totalorder %s25, %s26
      %p40 = scmp.eq.s32.totalorder %s18, 1
      %p41 = por %p39, %p40
      %p43 = scmp.ne.s32.totalorder %s26, %s42
      %p44 = scmp.eq.s32.totalorder %s18, 0
      %p45 = por %p43, %p44
      %s47 = sadd.s32 %s46, 1
      %p50 = scmp.eq.s32.totalorder %s12, 1
      %p51 = scmp.ne.s32.totalorder %s46, %s48
      %p52 = scmp.eq.s32.totalorder %s12, 0
      %p53 = por %p51, %p52
      %p54 = scmp.ne.s32.totalorder %s46, %s48
      %p55 = scmp.eq.s32.totalorder %s17, 1
      %p56 = por %p54, %p55
      %p57 = scmp.ne.s32.totalorder %s48, %s49
      %p58 = scmp.eq.s32.totalorder %s17, 0
      %p59 = por %p57, %p58
      %p60 = scmp.ne.s32.totalorder %s48, %s49
      %p61 = scmp.eq.s32.totalorder %s18, 1
      %p62 = por %p60, %p61
      %p64 = scmp.ne.s32.totalorder %s49, %s63
      %p65 = scmp.eq.s32.totalorder %s18, 0
      %p66 = por %p64, %p65
      %s67 = ssub.s32 %s12, %s19
      %p68 = scmp.eq.s32.totalorder %s67, 0
      %s70 = sadd.s32 %s69, 1
      %s71 = scalar_select %p68, %s69, %s70
      %p74 = pneg %p68
      %p75 = scmp.eq.s32.totalorder %s12, 1
      %p76 = por %p74, %p75
      %p77 = scmp.ne.s32.totalorder %s69, %s72
      %p78 = scmp.eq.s32.totalorder %s12, 0
      %p79 = por %p77, %p78
      %p80 = scmp.ne.s32.totalorder %s69, %s72
      %p81 = scmp.eq.s32.totalorder %s17, 1
      %p82 = por %p80, %p81
      %p83 = scmp.ne.s32.totalorder %s72, %s73
      %p84 = scmp.eq.s32.totalorder %s17, 0
      %p85 = por %p83, %p84
      %p86 = scmp.ne.s32.totalorder %s72, %s73
      %p87 = scmp.eq.s32.totalorder %s18, 1
      %p88 = por %p86, %p87
      %p90 = scmp.ne.s32.totalorder %s73, %s89
      %p91 = scmp.eq.s32.totalorder %s18, 0
      %p92 = por %p90, %p91
      %p93 = scmp.le.s32.totalorder 1, %s12
      %p94 = scmp.lt.s32.totalorder %s12, 3
      %p95 = pnand %p93, %p94
      %p96 = pneg %p95
      // Predicated region
      $region9: #{tpu_custom_call.1} parent=5 // pred_check
        _
      $region10: #{tpu_custom_call.1} parent=5 // pred_check_branch
        %98 = sbr.rel (%p95) target = $region12
      $region11: #{tpu_custom_call.1} parent=5 // pred_region
        %s99 = ssub.s32 %s12, 1
        // Predicated region
        $region13: #{tpu_custom_call.1} parent=11 // pred_check
          %p100 = pneg %p59
        $region14: #{tpu_custom_call.1} parent=11 // pred_check_branch
          %102 = sbr.rel (%p100) target = $region16
        $region15: #{tpu_custom_call.1} parent=11 // pred_region
          %s104 = ssub.s32 1280, 1280
          %105 = vsyncadd [#allocation5], %s104
          %s106 = sshll.u32 [#allocation4], 4
          %s107 = int_to_ptr.vmem [resolvable:$true] %s106
          %112 = dma.hbm_to_vmem [thread:$0]  %s1, 1280, %s107, [#allocation5], 128, 128, 8
        $region16: #{tpu_custom_call.1} parent=11 // pred_fallthru
          _
      $region12: #{tpu_custom_call.1} parent=5 // pred_fallthru
        _
      %p113 = scmp.lt.s32.totalorder %s12, 2
      // Predicated region
      $region17: #{tpu_custom_call.1} parent=5 // pred_check
        %p114 = pneg %p113
      $region18: #{tpu_custom_call.1} parent=5 // pred_check_branch
        %116 = sbr.rel (%p114) target = $region20
      $region19: #{tpu_custom_call.1} parent=5 // pred_region
        // Predicated region
        $region21: #{tpu_custom_call.1} parent=19 // pred_check
          %p117 = pneg %p32
        $region22: #{tpu_custom_call.1} parent=19 // pred_check_branch
          %119 = sbr.rel (%p117) target = $region24
        $region23: #{tpu_custom_call.1} parent=19 // pred_region
          %s120 = sand.u32 %s22, 1
          %s121 = scalar_lea.sflag [#allocation3], %s120
          %s122 = sand.u32 %s22, 1
          %s123 = smul.addr %s122, 16
          %s124 = scalar_lea.vmem [#allocation2], %s123
          %s126 = ssub.s32 256, 256
          %127 = vsyncadd %s121, %s126
          %s128 = smul.addr %s12, 2
          %s129 = smul.addr %s128, 128
          %s130 = scalar_lea.hbm %s0, %s129
          %s131 = sshll.u32 %s124, 4
          %s132 = int_to_ptr.vmem [resolvable:$true] %s131
          %137 = dma.hbm_to_vmem [thread:$0]  %s130, 256, %s132, %s121, 128, 128, 8
        $region24: #{tpu_custom_call.1} parent=19 // pred_fallthru
          _
      $region20: #{tpu_custom_call.1} parent=5 // pred_fallthru
        _
      %p138 = scmp.le.s32.totalorder 1, %s12
      %p139 = scmp.lt.s32.totalorder %s12, 3
      %p140 = pnand %p138, %p139
      %p141 = pneg %p140
      // Predicated region
      $region25: #{tpu_custom_call.1} parent=5 // pred_check
        _
      $region26: #{tpu_custom_call.1} parent=5 // pred_check_branch
        %143 = sbr.rel (%p140) target = $region28
      $region27: #{tpu_custom_call.1} parent=5 // pred_region
        %s144 = ssub.s32 %s12, 1
        %s145 = sand.u32 %s25, 1
        %s146 = scalar_lea.sflag [#allocation3], %s145
        %s147 = sand.u32 %s25, 1
        %s148 = smul.addr %s147, 16
        %s149 = scalar_lea.vmem [#allocation2], %s148
        // Predicated region
        $region29: #{tpu_custom_call.1} parent=27 // pred_check
          %p150 = pneg %p38
        $region30: #{tpu_custom_call.1} parent=27 // pred_check_branch
          %152 = sbr.rel (%p150) target = $region32
        $region31: #{tpu_custom_call.1} parent=27 // pred_region
          %153 = dma.done %s146, 256
        $region32: #{tpu_custom_call.1} parent=27 // pred_fallthru
          _
        // Predicated region
        $region33: #{tpu_custom_call.1} parent=27 // pred_check
          %p154 = pneg %p59
        $region34: #{tpu_custom_call.1} parent=27 // pred_check_branch
          %156 = sbr.rel (%p154) target = $region36
        $region35: #{tpu_custom_call.1} parent=27 // pred_region
          %157 = dma.done [#allocation5], 1280
        $region36: #{tpu_custom_call.1} parent=27 // pred_fallthru
          _
        %s158 = sand.u32 %s25, 1
        %s159 = scalar_lea.sflag [#allocation3], %s158
        %s160 = sand.u32 %s25, 1
        %s161 = smul.addr %s160, 16
        %s162 = scalar_lea.vmem [#allocation2], %s161
        %p163 = pneg %p38
        %p164 = pneg %p35
        %p165 = pneg %p59
        %p166 = pneg %p56
        %p167 = pneg %p85
        %p168 = pneg %p82
        %p169 = scmp.lt.s32.totalorder %s17, 1
        %s170 = scalar_select %p169, %s17, 1
        %s171 = smul.addr %s170, 2
        %s172 = smul.addr %s171, 8
        %s173 = scalar_lea.vmem %s2, %s172
        %p174 = scmp.lt.s32.totalorder %s17, 1
        %s175 = scalar_select %p174, %s17, 1
        %s176 = smul.addr %s175, 2
        %s177 = smul.addr %s176, 8
        %s178 = scalar_lea.vmem %s2, %s177
        %v179 = vld [vmem:[#allocation4] sm:$0xff]
        %v180 = vld [vmem:[#allocation4 + $0x8] sm:$0xff]
        %s181 = scalar_lea.vmem [#allocation4], 16
        %v182 = vld [vmem:[%s181] sm:$0xff]
        %v183 = vld [vmem:[%s181 + $0x8] sm:$0xff]
        %s184 = scalar_lea.vmem [#allocation4], 32
        %v185 = vld [vmem:[%s184] sm:$0xff]
        %v186 = vld [vmem:[%s184 + $0x8] sm:$0xff]
        %s187 = scalar_lea.vmem [#allocation4], 48
        %v188 = vld [vmem:[%s187] sm:$0xff]
        %v189 = vld [vmem:[%s187 + $0x8] sm:$0xff]
        %s190 = scalar_lea.vmem [#allocation4], 64
        %v191 = vld [vmem:[%s190] sm:$0xff]
        %v192 = vld [vmem:[%s190 + $0x8] sm:$0xff]
        %v193 = vld [vmem:[%s149] sm:$0xff]
        %v194 = vld [vmem:[%s149 + $0x8] sm:$0xff]
        %vm197 = vcmask 1046528
        %v198 = vrot.slane %v193, 1
        %v199 = vrot.slane %v194, 1
        %v200 = vsel %vm197, %v198, %v199
        %vm201 = vcmask 130048
        %v202 = vsel %vm201, %v200, 0
        %v204 = vsel %vm201, %v199, 0
        %206 = vmatprep.subr.mxu0 0.0
        %207 = vmatpush1.msra.mxu0 0.0
        %208 = vmatprep.subr.mxu0 0.0
        %209 = vmatpush1.msra.mxu0 0.0
        %210 = vmatprep.subr.mxu0 0.0
        %211 = vmatpush1.msra.mxu0 0.0
        %212 = vmatprep.subr.mxu0 0.0
        %213 = vmatpush1.msra.mxu0 0.0
        %214 = vmatprep.subr.mxu0 0.0
        %215 = vmatpush1.msra.mxu0 0.0
        %216 = vmatprep.subr.mxu0 0.0
        %217 = vmatpush1.msra.mxu0 0.0
        %218 = vmatprep.subr.mxu0 0.0
        %219 = vmatpush1.msra.mxu0 0.0
        %220 = vmatprep.subr.mxu0 0.0
        %221 = vmatpush1.msra.mxu0 0.0
        %222 = vmatprep.subr.mxu0 0.0
        %223 = vmatpush1.msra.mxu0 0.0
        %224 = vmatprep.subr.mxu0 0.0
        %225 = vmatpush1.msra.mxu0 0.0
        %226 = vmatprep.subr.mxu0 0.0
        %227 = vmatpush1.msra.mxu0 0.0
        %228 = vmatprep.subr.mxu0 0.0
        %229 = vmatpush1.msra.mxu0 0.0
        %230 = vmatprep.subr.mxu0 0.0
        %231 = vmatpush1.msra.mxu0 0.0
        %232 = vmatprep.subr.mxu0 0.0
        %233 = vmatpush1.msra.mxu0 0.0
        %234 = vmatprep.subr.mxu0 0.0
        %235 = vmatpush1.msra.mxu0 %v183
        %236 = vmatprep.subr.mxu0 0.0
        %237 = vmatpush1.msra.mxu0 %v182
        %238 = vmatprep.subr.mxu0 0.0
        %239 = vmatpush2.msra.mxu0 0.0
        %240 = vmatprep.subr.mxu0 0.0
        %241 = vmatpush2.msra.mxu0 0.0
        %242 = vmatprep.subr.mxu0 0.0
        %243 = vmatpush2.msra.mxu0 0.0
        %244 = vmatprep.subr.mxu0 0.0
        %245 = vmatpush2.msra.mxu0 0.0
        %246 = vmatprep.subr.mxu0 0.0
        %247 = vmatpush2.msra.mxu0 0.0
        %248 = vmatprep.subr.mxu0 0.0
        %249 = vmatpush2.msra.mxu0 0.0
        %250 = vmatprep.subr.mxu0 0.0
        %251 = vmatpush2.msra.mxu0 0.0
        %252 = vmatprep.subr.mxu0 0.0
        %253 = vmatpush2.msra.mxu0 0.0
        %254 = vmatprep.subr.mxu0 0.0
        %255 = vmatpush2.msra.mxu0 0.0
        %256 = vmatprep.subr.mxu0 0.0
        %257 = vmatpush2.msra.mxu0 0.0
        %258 = vmatprep.subr.mxu0 0.0
        %259 = vmatpush2.msra.mxu0 0.0
        %260 = vmatprep.subr.mxu0 0.0
        %261 = vmatpush2.msra.mxu0 0.0
        %262 = vmatprep.subr.mxu0 0.0
        %263 = vmatpush2.msra.mxu0 0.0
        %264 = vmatprep.subr.mxu0 0.0
        %265 = vmatpush2.msra.mxu0 0.0
        %266 = vmatprep.subr.mxu0 0.0
        %267 = vmatpush2.msra.mxu0 0.0
        %268 = vmatprep.subr.mxu0 0.0
        %269 = vmatpush2.msra.mxu0 0.0
        %270 = vmatprep.mubr.f32.mxu0 0.0
        %271 = vmatmul.mubr.f32.gmra.mxu0 %v202
        %v272 = vpop.f32.mrf.mxu0
        %v273 = vadd.f32 0.0, %v272
        %v274 = vpop.f32.mrf.mxu0
        %275 = vmatprep.mubr.f32.mxu0 0.0
        %276 = vmatmul.mubr.f32.gmra.mxu0 %v204
        %v277 = vpop.f32.mrf.mxu0
        %v278 = vadd.f32 0.0, %v277
        %v279 = vpop.f32.mrf.mxu0
        %280 = vdwg.mxu0
        %v281 = vsel %vm201, %v193, 0
        %v283 = vsel %vm201, %v194, 0
        %285 = vmatprep.subr.mxu0 0.0
        %286 = vmatpush1.msra.mxu0 0.0
        %287 = vmatprep.subr.mxu0 0.0
        %288 = vmatpush1.msra.mxu0 0.0
        %289 = vmatprep.subr.mxu0 0.0
        %290 = vmatpush1.msra.mxu0 0.0
        %291 = vmatprep.subr.mxu0 0.0
        %292 = vmatpush1.msra.mxu0 0.0
        %293 = vmatprep.subr.mxu0 0.0
        %294 = vmatpush1.msra.mxu0 0.0
        %295 = vmatprep.subr.mxu0 0.0
        %296 = vmatpush1.msra.mxu0 0.0
        %297 = vmatprep.subr.mxu0 0.0
        %298 = vmatpush1.msra.mxu0 0.0
        %299 = vmatprep.subr.mxu0 0.0
        %300 = vmatpush1.msra.mxu0 0.0
        %301 = vmatprep.subr.mxu0 0.0
        %302 = vmatpush1.msra.mxu0 0.0
        %303 = vmatprep.subr.mxu0 0.0
        %304 = vmatpush1.msra.mxu0 0.0
        %305 = vmatprep.subr.mxu0 0.0
        %306 = vmatpush1.msra.mxu0 0.0
        %307 = vmatprep.subr.mxu0 0.0
        %308 = vmatpush1.msra.mxu0 0.0
        %309 = vmatprep.subr.mxu0 0.0
        %310 = vmatpush1.msra.mxu0 0.0
        %311 = vmatprep.subr.mxu0 0.0
        %312 = vmatpush1.msra.mxu0 0.0
        %313 = vmatprep.subr.mxu0 0.0
        %314 = vmatpush1.msra.mxu0 %v180
        %315 = vmatprep.subr.mxu0 0.0
        %316 = vmatpush1.msra.mxu0 %v179
        %317 = vmatprep.subr.mxu0 0.0
        %318 = vmatpush2.msra.mxu0 0.0
        %319 = vmatprep.subr.mxu0 0.0
        %320 = vmatpush2.msra.mxu0 0.0
        %321 = vmatprep.subr.mxu0 0.0
        %322 = vmatpush2.msra.mxu0 0.0
        %323 = vmatprep.subr.mxu0 0.0
        %324 = vmatpush2.msra.mxu0 0.0
        %325 = vmatprep.subr.mxu0 0.0
        %326 = vmatpush2.msra.mxu0 0.0
        %327 = vmatprep.subr.mxu0 0.0
        %328 = vmatpush2.msra.mxu0 0.0
        %329 = vmatprep.subr.mxu0 0.0
        %330 = vmatpush2.msra.mxu0 0.0
        %331 = vmatprep.subr.mxu0 0.0
        %332 = vmatpush2.msra.mxu0 0.0
        %333 = vmatprep.subr.mxu0 0.0
        %334 = vmatpush2.msra.mxu0 0.0
        %335 = vmatprep.subr.mxu0 0.0
        %336 = vmatpush2.msra.mxu0 0.0
        %337 = vmatprep.subr.mxu0 0.0
        %338 = vmatpush2.msra.mxu0 0.0
        %339 = vmatprep.subr.mxu0 0.0
        %340 = vmatpush2.msra.mxu0 0.0
        %341 = vmatprep.subr.mxu0 0.0
        %342 = vmatpush2.msra.mxu0 0.0
        %343 = vmatprep.subr.mxu0 0.0
        %344 = vmatpush2.msra.mxu0 0.0
        %345 = vmatprep.subr.mxu0 0.0
        %346 = vmatpush2.msra.mxu0 0.0
        %347 = vmatprep.subr.mxu0 0.0
        %348 = vmatpush2.msra.mxu0 0.0
        %349 = vmatprep.mubr.f32.mxu0 0.0
        %350 = vmatmul.mubr.f32.gmra.mxu0 %v281
        %v351 = vpop.f32.mrf.mxu0
        %v352 = vadd.f32 %v273, %v351
        %v353 = vpop.f32.mrf.mxu0
        %354 = vmatprep.mubr.f32.mxu0 0.0
        %355 = vmatmul.mubr.f32.gmra.mxu0 %v283
        %v356 = vpop.f32.mrf.mxu0
        %v357 = vadd.f32 %v278, %v356
        %v358 = vpop.f32.mrf.mxu0
        %359 = vdwg.mxu0
        %vm360 = vcmask 1045504
        %v361 = vrot.slane %v193, 2
        %v362 = vrot.slane %v194, 2
        %v363 = vsel %vm360, %v361, %v362
        %v364 = vsel %vm201, %v363, 0
        %v366 = vsel %vm201, %v362, 0
        %368 = vmatprep.subr.mxu0 0.0
        %369 = vmatpush1.msra.mxu0 0.0
        %370 = vmatprep.subr.mxu0 0.0
        %371 = vmatpush1.msra.mxu0 0.0
        %372 = vmatprep.subr.mxu0 0.0
        %373 = vmatpush1.msra.mxu0 0.0
        %374 = vmatprep.subr.mxu0 0.0
        %375 = vmatpush1.msra.mxu0 0.0
        %376 = vmatprep.subr.mxu0 0.0
        %377 = vmatpush1.msra.mxu0 0.0
        %378 = vmatprep.subr.mxu0 0.0
        %379 = vmatpush1.msra.mxu0 0.0
        %380 = vmatprep.subr.mxu0 0.0
        %381 = vmatpush1.msra.mxu0 0.0
        %382 = vmatprep.subr.mxu0 0.0
        %383 = vmatpush1.msra.mxu0 0.0
        %384 = vmatprep.subr.mxu0 0.0
        %385 = vmatpush1.msra.mxu0 0.0
        %386 = vmatprep.subr.mxu0 0.0
        %387 = vmatpush1.msra.mxu0 0.0
        %388 = vmatprep.subr.mxu0 0.0
        %389 = vmatpush1.msra.mxu0 0.0
        %390 = vmatprep.subr.mxu0 0.0
        %391 = vmatpush1.msra.mxu0 0.0
        %392 = vmatprep.subr.mxu0 0.0
        %393 = vmatpush1.msra.mxu0 0.0
        %394 = vmatprep.subr.mxu0 0.0
        %395 = vmatpush1.msra.mxu0 0.0
        %396 = vmatprep.subr.mxu0 0.0
        %397 = vmatpush1.msra.mxu0 %v186
        %398 = vmatprep.subr.mxu0 0.0
        %399 = vmatpush1.msra.mxu0 %v185
        %400 = vmatprep.subr.mxu0 0.0
        %401 = vmatpush2.msra.mxu0 0.0
        %402 = vmatprep.subr.mxu0 0.0
        %403 = vmatpush2.msra.mxu0 0.0
        %404 = vmatprep.subr.mxu0 0.0
        %405 = vmatpush2.msra.mxu0 0.0
        %406 = vmatprep.subr.mxu0 0.0
        %407 = vmatpush2.msra.mxu0 0.0
        %408 = vmatprep.subr.mxu0 0.0
        %409 = vmatpush2.msra.mxu0 0.0
        %410 = vmatprep.subr.mxu0 0.0
        %411 = vmatpush2.msra.mxu0 0.0
        %412 = vmatprep.subr.mxu0 0.0
        %413 = vmatpush2.msra.mxu0 0.0
        %414 = vmatprep.subr.mxu0 0.0
        %415 = vmatpush2.msra.mxu0 0.0
        %416 = vmatprep.subr.mxu0 0.0
        %417 = vmatpush2.msra.mxu0 0.0
        %418 = vmatprep.subr.mxu0 0.0
        %419 = vmatpush2.msra.mxu0 0.0
        %420 = vmatprep.subr.mxu0 0.0
        %421 = vmatpush2.msra.mxu0 0.0
        %422 = vmatprep.subr.mxu0 0.0
        %423 = vmatpush2.msra.mxu0 0.0
        %424 = vmatprep.subr.mxu0 0.0
        %425 = vmatpush2.msra.mxu0 0.0
        %426 = vmatprep.subr.mxu0 0.0
        %427 = vmatpush2.msra.mxu0 0.0
        %428 = vmatprep.subr.mxu0 0.0
        %429 = vmatpush2.msra.mxu0 0.0
        %430 = vmatprep.subr.mxu0 0.0
        %431 = vmatpush2.msra.mxu0 0.0
        %432 = vmatprep.mubr.f32.mxu0 0.0
        %433 = vmatmul.mubr.f32.gmra.mxu0 %v364
        %v434 = vpop.f32.mrf.mxu0
        %v435 = vadd.f32 0.0, %v434
        %v436 = vpop.f32.mrf.mxu0
        %437 = vmatprep.mubr.f32.mxu0 0.0
        %438 = vmatmul.mubr.f32.gmra.mxu0 %v366
        %v439 = vpop.f32.mrf.mxu0
        %v440 = vadd.f32 0.0, %v439
        %v441 = vpop.f32.mrf.mxu0
        %442 = vdwg.mxu0
        %v443 = vadd.f32 %v352, %v435
        %v444 = vadd.f32 %v357, %v440
        %vm445 = vcmask 1044480
        %v446 = vrot.slane %v193, 3
        %v447 = vrot.slane %v194, 3
        %v448 = vsel %vm445, %v446, %v447
        %v449 = vsel %vm201, %v448, 0
        %v451 = vsel %vm201, %v447, 0
        %453 = vmatprep.subr.mxu0 0.0
        %454 = vmatpush1.msra.mxu0 0.0
        %455 = vmatprep.subr.mxu0 0.0
        %456 = vmatpush1.msra.mxu0 0.0
        %457 = vmatprep.subr.mxu0 0.0
        %458 = vmatpush1.msra.mxu0 0.0
        %459 = vmatprep.subr.mxu0 0.0
        %460 = vmatpush1.msra.mxu0 0.0
        %461 = vmatprep.subr.mxu0 0.0
        %462 = vmatpush1.msra.mxu0 0.0
        %463 = vmatprep.subr.mxu0 0.0
        %464 = vmatpush1.msra.mxu0 0.0
        %465 = vmatprep.subr.mxu0 0.0
        %466 = vmatpush1.msra.mxu0 0.0
        %467 = vmatprep.subr.mxu0 0.0
        %468 = vmatpush1.msra.mxu0 0.0
        %469 = vmatprep.subr.mxu0 0.0
        %470 = vmatpush1.msra.mxu0 0.0
        %471 = vmatprep.subr.mxu0 0.0
        %472 = vmatpush1.msra.mxu0 0.0
        %473 = vmatprep.subr.mxu0 0.0
        %474 = vmatpush1.msra.mxu0 0.0
        %475 = vmatprep.subr.mxu0 0.0
        %476 = vmatpush1.msra.mxu0 0.0
        %477 = vmatprep.subr.mxu0 0.0
        %478 = vmatpush1.msra.mxu0 0.0
        %479 = vmatprep.subr.mxu0 0.0
        %480 = vmatpush1.msra.mxu0 0.0
        %481 = vmatprep.subr.mxu0 0.0
        %482 = vmatpush1.msra.mxu0 %v189
        %483 = vmatprep.subr.mxu0 0.0
        %484 = vmatpush1.msra.mxu0 %v188
        %485 = vmatprep.subr.mxu0 0.0
        %486 = vmatpush2.msra.mxu0 0.0
        %487 = vmatprep.subr.mxu0 0.0
        %488 = vmatpush2.msra.mxu0 0.0
        %489 = vmatprep.subr.mxu0 0.0
        %490 = vmatpush2.msra.mxu0 0.0
        %491 = vmatprep.subr.mxu0 0.0
        %492 = vmatpush2.msra.mxu0 0.0
        %493 = vmatprep.subr.mxu0 0.0
        %494 = vmatpush2.msra.mxu0 0.0
        %495 = vmatprep.subr.mxu0 0.0
        %496 = vmatpush2.msra.mxu0 0.0
        %497 = vmatprep.subr.mxu0 0.0
        %498 = vmatpush2.msra.mxu0 0.0
        %499 = vmatprep.subr.mxu0 0.0
        %500 = vmatpush2.msra.mxu0 0.0
        %501 = vmatprep.subr.mxu0 0.0
        %502 = vmatpush2.msra.mxu0 0.0
        %503 = vmatprep.subr.mxu0 0.0
        %504 = vmatpush2.msra.mxu0 0.0
        %505 = vmatprep.subr.mxu0 0.0
        %506 = vmatpush2.msra.mxu0 0.0
        %507 = vmatprep.subr.mxu0 0.0
        %508 = vmatpush2.msra.mxu0 0.0
        %509 = vmatprep.subr.mxu0 0.0
        %510 = vmatpush2.msra.mxu0 0.0
        %511 = vmatprep.subr.mxu0 0.0
        %512 = vmatpush2.msra.mxu0 0.0
        %513 = vmatprep.subr.mxu0 0.0
        %514 = vmatpush2.msra.mxu0 0.0
        %515 = vmatprep.subr.mxu0 0.0
        %516 = vmatpush2.msra.mxu0 0.0
        %517 = vmatprep.mubr.f32.mxu0 0.0
        %518 = vmatmul.mubr.f32.gmra.mxu0 %v449
        %v519 = vpop.f32.mrf.mxu0
        %v520 = vadd.f32 0.0, %v519
        %v521 = vpop.f32.mrf.mxu0
        %522 = vmatprep.mubr.f32.mxu0 0.0
        %523 = vmatmul.mubr.f32.gmra.mxu0 %v451
        %v524 = vpop.f32.mrf.mxu0
        %v525 = vadd.f32 0.0, %v524
        %v526 = vpop.f32.mrf.mxu0
        %527 = vdwg.mxu0
        %v528 = vadd.f32 %v443, %v520
        %v529 = vadd.f32 %v444, %v525
        %vm530 = vcmask 1043456
        %v531 = vrot.slane %v193, 4
        %v532 = vrot.slane %v194, 4
        %v533 = vsel %vm530, %v531, %v532
        %v534 = vsel %vm201, %v533, 0
        %v536 = vsel %vm201, %v532, 0
        %538 = vmatprep.subr.mxu0 0.0
        %539 = vmatpush1.msra.mxu0 0.0
        %540 = vmatprep.subr.mxu0 0.0
        %541 = vmatpush1.msra.mxu0 0.0
        %542 = vmatprep.subr.mxu0 0.0
        %543 = vmatpush1.msra.mxu0 0.0
        %544 = vmatprep.subr.mxu0 0.0
        %545 = vmatpush1.msra.mxu0 0.0
        %546 = vmatprep.subr.mxu0 0.0
        %547 = vmatpush1.msra.mxu0 0.0
        %548 = vmatprep.subr.mxu0 0.0
        %549 = vmatpush1.msra.mxu0 0.0
        %550 = vmatprep.subr.mxu0 0.0
        %551 = vmatpush1.msra.mxu0 0.0
        %552 = vmatprep.subr.mxu0 0.0
        %553 = vmatpush1.msra.mxu0 0.0
        %554 = vmatprep.subr.mxu0 0.0
        %555 = vmatpush1.msra.mxu0 0.0
        %556 = vmatprep.subr.mxu0 0.0
        %557 = vmatpush1.msra.mxu0 0.0
        %558 = vmatprep.subr.mxu0 0.0
        %559 = vmatpush1.msra.mxu0 0.0
        %560 = vmatprep.subr.mxu0 0.0
        %561 = vmatpush1.msra.mxu0 0.0
        %562 = vmatprep.subr.mxu0 0.0
        %563 = vmatpush1.msra.mxu0 0.0
        %564 = vmatprep.subr.mxu0 0.0
        %565 = vmatpush1.msra.mxu0 0.0
        %566 = vmatprep.subr.mxu0 0.0
        %567 = vmatpush1.msra.mxu0 %v192
        %568 = vmatprep.subr.mxu0 0.0
        %569 = vmatpush1.msra.mxu0 %v191
        %570 = vmatprep.subr.mxu0 0.0
        %571 = vmatpush2.msra.mxu0 0.0
        %572 = vmatprep.subr.mxu0 0.0
        %573 = vmatpush2.msra.mxu0 0.0
        %574 = vmatprep.subr.mxu0 0.0
        %575 = vmatpush2.msra.mxu0 0.0
        %576 = vmatprep.subr.mxu0 0.0
        %577 = vmatpush2.msra.mxu0 0.0
        %578 = vmatprep.subr.mxu0 0.0
        %579 = vmatpush2.msra.mxu0 0.0
        %580 = vmatprep.subr.mxu0 0.0
        %581 = vmatpush2.msra.mxu0 0.0
        %582 = vmatprep.subr.mxu0 0.0
        %583 = vmatpush2.msra.mxu0 0.0
        %584 = vmatprep.subr.mxu0 0.0
        %585 = vmatpush2.msra.mxu0 0.0
        %586 = vmatprep.subr.mxu0 0.0
        %587 = vmatpush2.msra.mxu0 0.0
        %588 = vmatprep.subr.mxu0 0.0
        %589 = vmatpush2.msra.mxu0 0.0
        %590 = vmatprep.subr.mxu0 0.0
        %591 = vmatpush2.msra.mxu0 0.0
        %592 = vmatprep.subr.mxu0 0.0
        %593 = vmatpush2.msra.mxu0 0.0
        %594 = vmatprep.subr.mxu0 0.0
        %595 = vmatpush2.msra.mxu0 0.0
        %596 = vmatprep.subr.mxu0 0.0
        %597 = vmatpush2.msra.mxu0 0.0
        %598 = vmatprep.subr.mxu0 0.0
        %599 = vmatpush2.msra.mxu0 0.0
        %600 = vmatprep.subr.mxu0 0.0
        %601 = vmatpush2.msra.mxu0 0.0
        %602 = vmatprep.mubr.f32.mxu0 0.0
        %603 = vmatmul.mubr.f32.gmra.mxu0 %v534
        %v604 = vpop.f32.mrf.mxu0
        %v605 = vadd.f32 0.0, %v604
        %v606 = vpop.f32.mrf.mxu0
        %607 = vmatprep.mubr.f32.mxu0 0.0
        %608 = vmatmul.mubr.f32.gmra.mxu0 %v536
        %v609 = vpop.f32.mrf.mxu0
        %v610 = vadd.f32 0.0, %v609
        %v611 = vpop.f32.mrf.mxu0
        %612 = vdwg.mxu0
        %v613 = vadd.f32 %v528, %v605
        %v614 = vadd.f32 %v529, %v610
        %615 = vst [vmem:[%s178] sm:$0xff] %v613
        %616 = vst [vmem:[%s178 + $0x8] sm:$0xf] %v614
        %p617 = scmp.lt.s32.totalorder %s17, 1
        %s618 = scalar_select %p617, %s17, 1
        %s619 = smul.addr %s618, 2
        %s620 = smul.addr %s619, 8
        %s621 = scalar_lea.vmem %s2, %s620
        // Predicated region
        $region37: #{tpu_custom_call.1} parent=27 // pred_check
          %p622 = pneg %p82
        $region38: #{tpu_custom_call.1} parent=27 // pred_check_branch
          %624 = sbr.rel (%p622) target = $region40
        $region39: #{tpu_custom_call.1} parent=27 // pred_region
          _
        $region40: #{tpu_custom_call.1} parent=27 // pred_fallthru
          _
      $region28: #{tpu_custom_call.1} parent=5 // pred_fallthru
        _
      %p625 = scmp.le.s32.totalorder 2, %s12
      // Predicated region
      $region41: #{tpu_custom_call.1} parent=5 // pred_check
        %p626 = pneg %p625
      $region42: #{tpu_custom_call.1} parent=5 // pred_check_branch
        %628 = sbr.rel (%p626) target = $region44
      $region43: #{tpu_custom_call.1} parent=5 // pred_region
        %s629 = ssub.s32 %s12, 2
        // Predicated region
        $region45: #{tpu_custom_call.1} parent=43 // pred_check
          %p630 = pneg %p88
        $region46: #{tpu_custom_call.1} parent=43 // pred_check_branch
          %632 = sbr.rel (%p630) target = $region48
        $region47: #{tpu_custom_call.1} parent=43 // pred_region
          %p633 = scmp.lt.s32.totalorder %s18, 1
          %s634 = scalar_select %p633, %s18, 1
          %s635 = smul.addr %s634, 2
          %s636 = smul.addr %s635, 8
          %s637 = scalar_lea.vmem %s2, %s636
        $region48: #{tpu_custom_call.1} parent=43 // pred_fallthru
          _
      $region44: #{tpu_custom_call.1} parent=5 // pred_fallthru
        _
    $region6: #{tpu_custom_call.1} parent=1 // loop_footer
      %s16 = sadd.s32 1, %s12
    $region7: #{tpu_custom_call.1} parent=1 // loop_footer_branch
      %11 = sbr.rel target = $region3
    $region8: #{tpu_custom_call.1} parent=1 // loop_exit
      _
    %638 = vsyncpa [#allocation3], 1
    %s639 = scalar_lea.sflag [#allocation3], 1
    %640 = vsyncpa %s639, 1
    %641 = vsyncpa [#allocation5], 1

</llo_original>
